<compile_context>
chip_gen: v6e
topology: v6e:2x2x1
jax: 0.10.0
libtpu: 0.0.40
codegen_flags: <defaults>
</compile_context>

<pallas_src>
import math

import jax
import jax.numpy as jnp
from jax.experimental import pallas as pl
from jax.experimental.pallas import tpu as pltpu

EPS = 1e-5  # PyTorch InstanceNorm2d default eps


def adain_kernel(x_ref, gamma_ref, beta_ref, o_ref):
    # x_ref:     (Rt, HW)  rows = (n, c) instances, lanes = flattened spatial
    # gamma_ref: (Rt, 1)
    # beta_ref:  (Rt, 1)
    # o_ref:     (Rt, HW)
    hw = x_ref.shape[-1]
    inv_hw = jnp.float32(1.0 / hw)

    x = x_ref[...].astype(jnp.float32)                       # single read of x
    mean = jnp.sum(x, axis=-1, keepdims=True) * inv_hw       # (Rt, 1)
    xc = x - mean                                            # reused below
    var = jnp.sum(xc * xc, axis=-1, keepdims=True) * inv_hw  # biased variance
    xn = xc * jax.lax.rsqrt(var + EPS)                       # (Rt, HW)

    out = (1.0 + gamma_ref[...]) * xn + beta_ref[...]
    o_ref[...] = out.astype(o_ref.dtype)


def _pick_row_tile(rows, hw, bytes_per_elem=4, target_bytes=2 << 20):
    """Largest row tile that (a) is a multiple of 8, (b) divides `rows`,
    (c) keeps a single x block <= target_bytes (safe for v7x's 64 MiB VMEM
    with double-buffering).  Falls back to the full row extent (always a
    legal block) when no such tile exists."""
    if rows <= 8:
        return rows
    max_rt = max(8, (target_bytes // (hw * bytes_per_elem)) // 8 * 8)
    rt = min(max_rt, rows)
    rt -= rt % 8
    while rt >= 8:
        if rows % rt == 0:
            return rt
        rt -= 8
    return rows


def adain(x, s, w, b):
    """x: (N, C, H, W) float32, s: (N, S), w: (2C, S), b: (2C,)."""
    N, C, H, W = x.shape
    HW = H * W
    rows = N * C

    # Style FC hoisted out of the kernel: one batched (N,S)x(S,2C) matmul.
    h = s @ w.T + b                                  # (N, 2C)
    gamma = h[:, :C].reshape(rows, 1).astype(jnp.float32)
    beta = h[:, C:].reshape(rows, 1).astype(jnp.float32)

    x2 = x.reshape(rows, HW)

    rt = _pick_row_tile(rows, HW, bytes_per_elem=x.dtype.itemsize)
    grid = (rows // rt,)

    bytes_accessed = 2 * rows * HW * x.dtype.itemsize + 2 * rows * 4
    cost = pl.CostEstimate(
        flops=5 * rows * HW,
        transcendentals=rows,
        bytes_accessed=bytes_accessed,
    )

    out = pl.pallas_call(
        adain_kernel,
        out_shape=jax.ShapeDtypeStruct((rows, HW), x.dtype),
        grid_spec=pltpu.PrefetchScalarGridSpec(
            num_scalar_prefetch=0,
            grid=grid,
            in_specs=[
                pl.BlockSpec((rt, HW), lambda i: (i, 0)),
                pl.BlockSpec((rt, 1), lambda i: (i, 0)),
                pl.BlockSpec((rt, 1), lambda i: (i, 0)),
            ],
            out_specs=pl.BlockSpec((rt, HW), lambda i: (i, 0)),
        ),
        compiler_params=pltpu.CompilerParams(
            dimension_semantics=("parallel",),
        ),
        cost_estimate=cost,
    )(x2, gamma, beta)
    return out.reshape(N, C, H, W)


def adain_ref(x, s, w, b):
    """Pure-JAX reference matching the PyTorch forward."""
    h = s @ w.T + b                                   # (N, 2C)
    gamma, beta = jnp.split(h, 2, axis=1)             # (N, C) each
    mean = jnp.mean(x, axis=(2, 3), keepdims=True)
    var = jnp.mean((x - mean) ** 2, axis=(2, 3), keepdims=True)
    xn = (x - mean) / jnp.sqrt(var + EPS)
    return (1.0 + gamma[:, :, None, None]) * xn + beta[:, :, None, None]


if __name__ == "__main__":
    # Small shapes consistent with the module: sty_dim=32, out_dim=4, 16x16 spatial.
    N, C, H, W = 2, 4, 16, 16
    STY = 32

    key = jax.random.PRNGKey(0)
    kw, kb, kx, ks = jax.random.split(key, 4)

    # Deterministic parameter init (mimics nn.Linear's uniform init bounds).
    bound = 1.0 / math.sqrt(STY)
    w = jax.random.uniform(kw, (2 * C, STY), minval=-bound, maxval=bound,
                           dtype=jnp.float32)
    b = jax.random.uniform(kb, (2 * C,), minval=-bound, maxval=bound,
                           dtype=jnp.float32)

    x = jax.random.normal(kx, (N, C, H, W), dtype=jnp.float32)
    s = jax.random.normal(ks, (N, STY), dtype=jnp.float32)

    out = adain(x, s, w, b)
    jax.block_until_ready(out)

    ref = adain_ref(x, s, w, b)
    assert out.shape == (N, C, H, W)
    assert jnp.allclose(out, ref, atol=1e-4, rtol=1e-4), (
        f"max abs diff {jnp.max(jnp.abs(out - ref))}"
    )

    print("KERNEL_OK")
</pallas_src>

<mosaic_0001>
module attributes {stable_mosaic.version = 11 : i64} {
  func.func @adain_kernel(%arg0: i32, %arg1: memref<8x256xf32, #tpu.memory_space<vmem>>, %arg2: memref<8x1xf32, #tpu.memory_space<vmem>>, %arg3: memref<8x1xf32, #tpu.memory_space<vmem>>, %arg4: memref<8x256xf32, #tpu.memory_space<vmem>>) attributes {dimension_semantics = [#tpu.dimension_semantics<parallel>], iteration_bounds = array<i64: 1>, scalar_prefetch = 0 : i64, scratch_operands = 0 : i64, tpu.core_type = #tpu.core_type<tc>, window_params = [{transform_indices = @transform_0, window_bounds = array<i64: 8, 256>}, {transform_indices = @transform_1, window_bounds = array<i64: 8, 1>}, {transform_indices = @transform_2, window_bounds = array<i64: 8, 1>}, {transform_indices = @transform_3, window_bounds = array<i64: 8, 256>}]} {
    %c0 = arith.constant 0 : index
    %c0_0 = arith.constant 0 : index
    %0 = vector.load %arg1[%c0, %c0_0] : memref<8x256xf32, #tpu.memory_space<vmem>>, vector<8x256xf32>
    %cst = arith.constant dense<0.000000e+00> : vector<8xf32>
    %1 = vector.multi_reduction <add>, %0, %cst [1] : vector<8x256xf32> to vector<8xf32>
    %2 = vector.shape_cast %1 : vector<8xf32> to vector<8x1xf32>
    %cst_1 = arith.constant 3.906250e-03 : f32
    %3 = vector.broadcast %cst_1 : f32 to vector<8x1xf32>
    %4 = arith.mulf %2, %3 : vector<8x1xf32>
    %5 = vector.broadcast %4 : vector<8x1xf32> to vector<8x256xf32>
    %6 = arith.subf %0, %5 : vector<8x256xf32>
    %7 = arith.mulf %6, %6 : vector<8x256xf32>
    %cst_2 = arith.constant dense<0.000000e+00> : vector<8xf32>
    %8 = vector.multi_reduction <add>, %7, %cst_2 [1] : vector<8x256xf32> to vector<8xf32>
    %9 = vector.shape_cast %8 : vector<8xf32> to vector<8x1xf32>
    %cst_3 = arith.constant 3.906250e-03 : f32
    %10 = vector.broadcast %cst_3 : f32 to vector<8x1xf32>
    %11 = arith.mulf %9, %10 : vector<8x1xf32>
    %cst_4 = arith.constant 9.99999974E-6 : f32
    %12 = vector.broadcast %cst_4 : f32 to vector<8x1xf32>
    %13 = arith.addf %11, %12 : vector<8x1xf32>
    %14 = math.rsqrt %13 : vector<8x1xf32>
    %15 = vector.broadcast %14 : vector<8x1xf32> to vector<8x256xf32>
    %16 = arith.mulf %6, %15 : vector<8x256xf32>
    %c0_5 = arith.constant 0 : index
    %c0_6 = arith.constant 0 : index
    %17 = vector.load %arg2[%c0_5, %c0_6] : memref<8x1xf32, #tpu.memory_space<vmem>>, vector<8x1xf32>
    %cst_7 = arith.constant 1.000000e+00 : f32
    %18 = vector.broadcast %cst_7 : f32 to vector<8x1xf32>
    %19 = arith.addf %18, %17 : vector<8x1xf32>
    %20 = vector.broadcast %19 : vector<8x1xf32> to vector<8x256xf32>
    %21 = arith.mulf %20, %16 : vector<8x256xf32>
    %c0_8 = arith.constant 0 : index
    %c0_9 = arith.constant 0 : index
    %22 = vector.load %arg3[%c0_8, %c0_9] : memref<8x1xf32, #tpu.memory_space<vmem>>, vector<8x1xf32>
    %23 = vector.broadcast %22 : vector<8x1xf32> to vector<8x256xf32>
    %24 = arith.addf %21, %23 : vector<8x256xf32>
    %c0_10 = arith.constant 0 : index
    %c0_11 = arith.constant 0 : index
    %25 = vector.load %arg4[%c0_10, %c0_11] : memref<8x256xf32, #tpu.memory_space<vmem>>, vector<8x256xf32>
    tpu.vector_store %arg4[%c0_10, %c0_11], %24 {strides = array<i32>} : memref<8x256xf32, #tpu.memory_space<vmem>>, vector<8x256xf32>,
    return
  }
  func.func @transform_0(%arg0: i32) -> (i32, i32) {
    %c0_i32 = arith.constant 0 : i32
    %c0_i32_0 = arith.constant 0 : i32
    return %arg0, %c0_i32 : i32, i32
  }
  func.func @transform_1(%arg0: i32) -> (i32, i32) {
    %c0_i32 = arith.constant 0 : i32
    %c0_i32_0 = arith.constant 0 : i32
    return %arg0, %c0_i32 : i32, i32
  }
  func.func @transform_2(%arg0: i32) -> (i32, i32) {
    %c0_i32 = arith.constant 0 : i32
    %c0_i32_0 = arith.constant 0 : i32
    return %arg0, %c0_i32 : i32, i32
  }
  func.func @transform_3(%arg0: i32) -> (i32, i32) {
    %c0_i32 = arith.constant 0 : i32
    %c0_i32_0 = arith.constant 0 : i32
    return %arg0, %c0_i32 : i32, i32
  }
}

</mosaic_0001>

<llo_original>
// kernel: tpu_custom_call.1
$region0: #{tpu_custom_call.1}
  #allocation0 [shape = 'u32[]', space=smem, size = 0x4, offset = 0x4, fixed_abs, tag = 'smem constant byte address 0x4 - core index']
  #allocation1 [shape = 'u32[144,128]{1,0:T(1,128)}', space=vmem, size = 0x12000, scoped, tag = 'internal scratch']
  %s0 = inlined_call_operand.vmem [shape: f32[8,256], index: 0, kind: input, shape index: {}]
  %s1 = inlined_call_operand.vmem [shape: f32[8,1], index: 1, kind: input, shape index: {}]
  %s2 = inlined_call_operand.vmem [shape: f32[8,1], index: 2, kind: input, shape index: {}]
  %s3 = inlined_call_operand.hbm [shape: f32[8,256], index: 3, kind: output, shape index: {}]
  %s4 = sld [smem:[#allocation0]]
  $region22: #{tpu_custom_call.1} parent=0
    _
  %s6 = ssub.s32 1, %s4
  %s7 = scalar_select 0, %s6, %s4
  $region1: #{tpu_custom_call.1} parent=0
    #allocation2 [shape = 'u8[8192]{0}', space=vmem, size = 0x2000, scoped, tag = 'output window, operand 0, single buffered']
    #allocation3 [shape = 's32[1]{0}', space=sflag, size = 0x4, scoped, tag = 'scoped memory for tpu_custom_call.1']
    %8 = vsyncpa [#allocation3], 0
    // Predicated region
    $region2: #{tpu_custom_call.1} parent=1 // pred_check
      _
    $region3: #{tpu_custom_call.1} parent=1 // pred_check_branch
      %10 = sbr.rel (0) target = $region5
    $region4: #{tpu_custom_call.1} parent=1 // pred_region
      _
    $region5: #{tpu_custom_call.1} parent=1 // pred_fallthru
      _
    // Predicated region
    $region6: #{tpu_custom_call.1} parent=1 // pred_check
      _
    $region7: #{tpu_custom_call.1} parent=1 // pred_check_branch
      %12 = sbr.rel (0) target = $region9
    $region8: #{tpu_custom_call.1} parent=1 // pred_region
      _
    $region9: #{tpu_custom_call.1} parent=1 // pred_fallthru
      _
    // Predicated region
    $region10: #{tpu_custom_call.1} parent=1 // pred_check
      _
    $region11: #{tpu_custom_call.1} parent=1 // pred_check_branch
      %14 = sbr.rel (0) target = $region13
    $region12: #{tpu_custom_call.1} parent=1 // pred_region
      _
    $region13: #{tpu_custom_call.1} parent=1 // pred_fallthru
      _
    %v15 = vld [vmem:[%s0] sm:$0xff]
    %v16 = vld [vmem:[%s0 + $0x8] sm:$0xff]
    %v17 = vadd.f32 %v15, %v16
    %18 = vadd.xlane.f32.xlu0 %v17
    %v19 = vpop.xlane.xlu0 %18
    %v20 = vmul.f32 %v19, 0.00390625
    %v21 = vsub.f32 %v15, %v20
    %v22 = vsub.f32 %v16, %v20
    %v23 = vmul.f32 %v21, %v21
    %v24 = vmul.f32 %v22, %v22
    %v25 = vadd.f32 %v23, %v24
    %26 = vadd.xlane.f32.xlu0 %v25
    %v27 = vpop.xlane.xlu0 %26
    %v28 = vmul.f32 %v27, 0.00390625
    %v29 = vadd.f32 %v28, 1e-05
    %v30 = vrsqrt.pop %v29
    %v31 = vmul.f32 %v21, %v30
    %v32 = vmul.f32 %v22, %v30
    %v33 = vld [vmem:[%s1] sm:$0xff]
    %v34 = vadd.f32 %v33, 1.0
    %36 = vset.pattern.permute.xlu0 0
    %37 = vperm.xlu0 %36, %v34
    %v38 = vpop.permute.xlu0 %37
    %v40 = vmul.f32 %v38, %v31
    %v41 = vmul.f32 %v38, %v32
    %v42 = vld [vmem:[%s2] sm:$0xff]
    %44 = vset.pattern.permute.xlu0 0
    %45 = vperm.xlu0 %44, %v42
    %v46 = vpop.permute.xlu0 %45
    %v48 = vadd.f32 %v40, %v46
    %v49 = vadd.f32 %v41, %v46
    %50 = vst [vmem:[#allocation2] sm:$0xff] %v48
    %51 = vst [vmem:[#allocation2 + $0x8] sm:$0xff] %v49
    // Predicated region
    $region14: #{tpu_custom_call.1} parent=1 // pred_check
      _
    $region15: #{tpu_custom_call.1} parent=1 // pred_check_branch
      %53 = sbr.rel (0) target = $region17
    $region16: #{tpu_custom_call.1} parent=1 // pred_region
      %s55 = ssub.s32 256, 256
      %56 = vsyncadd [#allocation3], %s55
      %s58 = sshll.u32 [#allocation2], 4
      %s59 = int_to_ptr.vmem [resolvable:$true] %s58
      %61 = dma.vmem_to_hbm [thread:$0]  %s59, 256, %s3, [#allocation3]
    $region17: #{tpu_custom_call.1} parent=1 // pred_fallthru
      _
    // Predicated region
    $region18: #{tpu_custom_call.1} parent=1 // pred_check
      _
    $region19: #{tpu_custom_call.1} parent=1 // pred_check_branch
      %63 = sbr.rel (0) target = $region21
    $region20: #{tpu_custom_call.1} parent=1 // pred_region
      %64 = dma.done [#allocation3], 256
    $region21: #{tpu_custom_call.1} parent=1 // pred_fallthru
      _
    %65 = vsyncpa [#allocation3], 1

</llo_original>
